<compile_context>
chip_gen: v7x
topology: tpu7x:2x2x1
jax: 0.10.0
libtpu: 0.0.40
codegen_flags: <defaults>
</compile_context>

<pallas_src>
import jax
import jax.numpy as jnp
from jax.experimental import pallas as pl
from jax.experimental.pallas import tpu as pltpu


_VMEM_LIMIT = 32 * 1024 * 1024       # portable cap (v7x has 64 MiB physical VMEM per TC)
_BLOCK_BUDGET = 12 * 1024 * 1024     # bytes of live blocks (inputs x2 buffers + f32 scratch)


def _cdiv(a, b):
    return -(-a // b)


# ----------------------------------------------------------------------------------
# Tile planning
# ----------------------------------------------------------------------------------
def _plan_flat(T, n_inputs, n_sums, itemsize):
    """Tile plan for a flat reduction over T elements.

    Returns (C, BR, n_chunks, inner, PT):
      C        lane width of a block (multiple of 128),
      BR       rows (sublanes) per block,
      n_chunks leading 'parallel' grid extent (megacore split),
      inner    inner 'arbitrary' grid extent (accumulation steps per chunk),
      PT       padded total element count (= n_chunks * inner * BR * C >= T).
    """
    if T >= 8 * 2048:
        C = 2048
    elif T >= 8 * 512:
        C = 512
    else:
        C = 128
    rows = _cdiv(T, C)
    # bytes per block-row: inputs double-buffered + one f32 accumulator slab per sum
    per_row = C * (2 * itemsize * n_inputs + 4 * n_sums)
    br = max(8, ((_BLOCK_BUDGET // per_row) // 8) * 8)
    if rows <= br:
        # single block: block shape equals the (padded) full array dims
        BR = rows if rows < 8 else ((rows + 7) // 8) * 8
        n_chunks, inner = 1, 1
    else:
        BR = br
        steps = _cdiv(rows, BR)
        n_chunks = 2 if steps >= 2 else 1
        inner = _cdiv(steps, n_chunks)
    PT = n_chunks * inner * BR * C
    return C, BR, n_chunks, inner, PT


def _plan_rows(N, B, n_inputs, itemsize):
    """Tile plan for per-row reductions over (B, N) arrays."""
    cap = 8192
    n128 = ((N + 127) // 128) * 128
    if n128 <= cap:
        TN = n128
        n_chunks, inner = 1, 1
    else:
        TN = cap
        steps = _cdiv(N, TN)
        n_chunks = 2 if steps >= 2 else 1
        inner = _cdiv(steps, n_chunks)
    PN = n_chunks * inner * TN
    return TN, n_chunks, inner, PN


# ----------------------------------------------------------------------------------
# Fused global multi-sum kernel (one HBM pass, many reductions)
# ----------------------------------------------------------------------------------
def _multi_sum_pallas(fns, arrays, scalars=None):
    """Global sums of len(fns) elementwise expressions over `arrays`, one HBM pass.

    arrays  : list of same-shape float arrays (any rank, any float dtype).
    fns     : callables fn(blocks, smem_ref) -> f32 array of block shape,
              where blocks = tuple of f32-widened input blocks.
    scalars : optional 1-D f32 array of runtime constants, exposed via SMEM.
    Returns : f32 vector of shape (len(fns),) with the global sums.
    """
    M = len(fns)
    K = len(arrays)
    T = int(arrays[0].size)
    itemsize = jnp.dtype(arrays[0].dtype).itemsize
    C, BR, n_chunks, inner, PT = _plan_flat(T, K, M, itemsize)
    R = PT // C
    need_mask = PT != T

    flats = []
    for a in arrays:
        f = a.reshape(-1)
        if need_mask:
            f = jnp.pad(f, (0, PT - T))
        flats.append(f.reshape(R, C))

    has_scalars = scalars is not None

    def kernel(*refs):
        off = 1 if has_scalars else 0
        s_ref = refs[0] if has_scalars else None
        in_refs = refs[off:off + K]
        out_ref = refs[off + K]
        acc_ref = refs[off + K + 1]
        p = pl.program_id(0)
        j = pl.program_id(1)

        @pl.when(j == 0)
        def _init():
            acc_ref[...] = jnp.zeros_like(acc_ref)

        blocks = tuple(r[...].astype(jnp.float32) for r in in_refs)
        if need_mask:
            row0 = (p * inner + j) * BR
            rid = jax.lax.broadcasted_iota(jnp.int32, (BR, C), 0) + row0
            cid = jax.lax.broadcasted_iota(jnp.int32, (BR, C), 1)
            valid = rid * C + cid < T
        for m, fn in enumerate(fns):
            v = fn(blocks, s_ref)
            if need_mask:
                v = jnp.where(valid, v, 0.0)
            acc_ref[m, :, :] += v           # pure VPU add per step

        @pl.when(j == inner - 1)
        def _finalize():
            # single cross-sublane reduce + lane-dense store, last step only
            for m in range(M):
                out_ref[0, m:m + 1, :] = jnp.sum(
                    acc_ref[m, :, :], axis=0, keepdims=True)

    in_specs = []
    args = []
    if has_scalars:
        in_specs.append(pl.BlockSpec(memory_space=pltpu.MemorySpace.SMEM))
        args.append(scalars.astype(jnp.float32))
    row_map = lambda p, j: (p * inner + j, 0)
    for f in flats:
        in_specs.append(pl.BlockSpec((BR, C), row_map))
        args.append(f)

    out = pl.pallas_call(
        kernel,
        out_shape=jax.ShapeDtypeStruct((n_chunks, M, C), jnp.float32),
        grid_spec=pltpu.PrefetchScalarGridSpec(
            num_scalar_prefetch=0,
            grid=(n_chunks, inner),
            in_specs=in_specs,
            out_specs=pl.BlockSpec((1, M, C), lambda p, j: (p, 0, 0)),
            scratch_shapes=[pltpu.VMEM((M, BR, C), jnp.float32)],
        ),
        compiler_params=pltpu.CompilerParams(
            dimension_semantics=("parallel", "arbitrary"),
            vmem_limit_bytes=_VMEM_LIMIT,
        ),
    )(*args)
    return jnp.sum(out, axis=(0, 2))


# ----------------------------------------------------------------------------------
# Fused per-row multi-sum kernel (non-saturating loss path)
# ----------------------------------------------------------------------------------
def _row_sums_pallas(arrays):
    """Per-row sums of K same-shape (B, N) arrays in a single fused HBM pass.

    Returns f32 array of shape (K, B)."""
    K = len(arrays)
    B, N = arrays[0].shape
    itemsize = jnp.dtype(arrays[0].dtype).itemsize
    TN, n_chunks, inner, PN = _plan_rows(N, B, K, itemsize)
    need_mask = PN != N
    padded = [jnp.pad(a, ((0, 0), (0, PN - N))) if need_mask else a for a in arrays]

    def kernel(*refs):
        in_refs = refs[:K]
        out_ref = refs[K]
        acc_ref = refs[K + 1]
        p = pl.program_id(0)
        j = pl.program_id(1)

        @pl.when(j == 0)
        def _init():
            acc_ref[...] = jnp.zeros_like(acc_ref)

        if need_mask:
            col0 = (p * inner + j) * TN
            cid = jax.lax.broadcasted_iota(jnp.int32, (B, TN), 1) + col0
            valid = cid < N
        for k in range(K):
            v = in_refs[k][...].astype(jnp.float32)
            if need_mask:
                v = jnp.where(valid, v, 0.0)
            acc_ref[k, :, :] += v

        @pl.when(j == inner - 1)
        def _finalize():
            for k in range(K):
                out_ref[0, k, :, :] = jnp.sum(
                    acc_ref[k, :, :], axis=-1, keepdims=True)

    col_map = lambda p, j: (0, p * inner + j)
    out = pl.pallas_call(
        kernel,
        out_shape=jax.ShapeDtypeStruct((n_chunks, K, B, 1), jnp.float32),
        grid_spec=pltpu.PrefetchScalarGridSpec(
            num_scalar_prefetch=0,
            grid=(n_chunks, inner),
            in_specs=[pl.BlockSpec((B, TN), col_map) for _ in arrays],
            out_specs=pl.BlockSpec((1, K, B, 1), lambda p, j: (p, 0, 0, 0)),
            scratch_shapes=[pltpu.VMEM((K, B, TN), jnp.float32)],
        ),
        compiler_params=pltpu.CompilerParams(
            dimension_semantics=("parallel", "arbitrary"),
            vmem_limit_bytes=_VMEM_LIMIT,
        ),
    )(*padded)
    return jnp.sum(out, axis=(0, 3))


# ----------------------------------------------------------------------------------
# Elementwise bodies (run inside the Pallas kernels, f32)
# ----------------------------------------------------------------------------------
def _softplus(x):
    return jnp.maximum(x, 0.0) + jnp.log1p(jnp.exp(-jnp.abs(x)))


def _hinge_elems(real, fake):
    return jnp.maximum(1.0 - real, 0.0) + jnp.maximum(1.0 + fake, 0.0)


def _vanilla_elems(real, fake):
    return _softplus(-real) + _softplus(fake)


# ----------------------------------------------------------------------------------
# Loss functions (hot path in Pallas)
# ----------------------------------------------------------------------------------
def hinge_discr_loss(fake_logits, real_logits):
    s = _multi_sum_pallas(
        [lambda b, s: _hinge_elems(b[1], b[0])], [fake_logits, real_logits])[0]
    return s / real_logits.size / 2.0


def hinge_gen_loss(fake):
    s = _multi_sum_pallas([lambda b, s: b[0]], [fake])[0]
    return -(s / fake.size)


def vanilla_discr_loss(fake_logits, real_logits):
    s = _multi_sum_pallas(
        [lambda b, s: _vanilla_elems(b[1], b[0])], [fake_logits, real_logits])[0]
    return s / real_logits.size / 2.0


def vanilla_gen_loss(fake):
    s = _multi_sum_pallas([lambda b, s: _softplus(-b[0])], [fake])[0]
    return s / fake.size


def _sigmoid_cross_entropy_with_logits(labels, logits):
    """non-saturating loss head (operates on tiny per-batch vectors; plain JAX)."""
    zeros = jnp.zeros_like(logits)
    condition = logits >= zeros
    relu_logits = jnp.where(condition, logits, zeros)
    neg_abs_logits = jnp.where(condition, -logits, logits)
    return relu_logits - logits * labels + jnp.log1p(jnp.exp(neg_abs_logits))


def non_saturate_discriminator_loss(logits_real, logits_fake):
    B = logits_fake.shape[0]
    r2 = logits_real.reshape(B, -1)
    f2 = logits_fake.reshape(B, -1)
    sums = _row_sums_pallas([r2, f2])            # one fused pass over both arrays
    mr = sums[0] / r2.shape[1]
    mf = sums[1] / f2.shape[1]
    real_loss = _sigmoid_cross_entropy_with_logits(jnp.ones_like(mr), mr)
    fake_loss = _sigmoid_cross_entropy_with_logits(jnp.zeros_like(mf), mf)
    return jnp.mean(real_loss + fake_loss) / 2.0


def non_saturate_gen_loss(logits_fake):
    B = logits_fake.shape[0]
    f2 = logits_fake.reshape(B, -1)
    mf = _row_sums_pallas([f2])[0] / f2.shape[1]
    return jnp.mean(_sigmoid_cross_entropy_with_logits(jnp.ones_like(mf), mf))


def lecam_reg(real_pred, fake_pred, lecam_ema):
    # EMA constants enter the kernel as a tiny SMEM operand (no host sync, no re-trace).
    ema = jnp.stack([jnp.asarray(lecam_ema.logits_real_ema, jnp.float32),
                     jnp.asarray(lecam_ema.logits_fake_ema, jnp.float32)])
    s = _multi_sum_pallas(
        [lambda b, sc: jnp.square(jnp.maximum(b[0] - sc[1], 0.0)),
         lambda b, sc: jnp.square(jnp.maximum(sc[0] - b[1], 0.0))],
        [real_pred, fake_pred], scalars=ema)
    return s[0] / real_pred.size + s[1] / fake_pred.size


def gradient_penalty(images, disc_forward_fn, use_WGAN=False):
    # TODO(synk): autograd through the discriminator has no Pallas equivalent;
    # jax.grad supplies the backward pass (glue), only the forward body is Pallas-able.
    grads = jax.grad(lambda x: jnp.sum(disc_forward_fn(x)))(images)
    g2 = grads.reshape(grads.shape[0], -1)
    sq = jnp.sum(g2 * g2, axis=1)
    if use_WGAN:
        return jnp.mean((jnp.sqrt(sq) - 1.0) ** 2)
    return jnp.mean(sq)


# ----------------------------------------------------------------------------------
# LeCAM EMA + BaseDiscriminator
# ----------------------------------------------------------------------------------
class LeCAM_EMA(object):
    """EMA of the mean logits, kept as device scalars (no .item() host syncs)."""

    def __init__(self, init=0.0, decay=0.999):
        self.logits_real_ema = jnp.asarray(init, jnp.float32)
        self.logits_fake_ema = jnp.asarray(init, jnp.float32)
        self.decay = decay

    def update_from_means(self, mean_real, mean_fake):
        d = self.decay
        self.logits_real_ema = self.logits_real_ema * d + mean_real * (1.0 - d)
        self.logits_fake_ema = self.logits_fake_ema * d + mean_fake * (1.0 - d)

    def update(self, logits_real, logits_fake):
        self.update_from_means(jnp.mean(logits_real), jnp.mean(logits_fake))


class BaseDiscriminator:
    # disciminator_network defaults to nn.Identity() in the reference implementation.
    default_params = {
        "loss_type": "hinge",
        "gen_loss_type": None,
        "disc_loss_type": None,
        "lambda_perceptual_loss": 1.0,
        "lambda_disc_loss": 1.0,
        "lambda_adversarial_loss": 1.0,
        "lambda_grad_penalty": 10.0,
        "lambda_lecam": 0.0,
        "adaptive_weight_max": 1000.0,
        "perceptual_model": "vgg16",
        "disable_adaptive_weight": False,
    }

    def __init__(self, **kwargs):
        for key, value in self.default_params.items():
            setattr(self, key, value)
        for key, value in kwargs.items():
            setattr(self, key, value)
        if self.loss_type is None:
            self.loss_type = "hinge"
        if self.gen_loss_type is None:
            self.gen_loss_type = self.loss_type
        if self.disc_loss_type is None:
            self.disc_loss_type = self.loss_type
        self.zero = jnp.asarray(0.0, jnp.float32)
        # TODO(synk): pretrained perceptual networks (VGG16-LPIPS / DINO / ResNet)
        # require external checkpoints; no Pallas-native equivalent here.
        self.perceptual_model = None
        self.lecam_ema = LeCAM_EMA() if self.lambda_lecam > 0 else None

    # ---- discriminator network (base class = Identity) ----
    def disc_forward(self, x):
        # Base class network is nn.Identity(): logits are the input itself.
        return x

    # ---- loss selection ----
    def compute_disc_loss(self, real_logits, fake_logits):
        if self.disc_loss_type == "hinge":
            return hinge_discr_loss(fake_logits, real_logits)
        elif self.disc_loss_type == "vanilla":
            return vanilla_discr_loss(fake_logits, real_logits)
        elif self.disc_loss_type == "non_saturate":
            return non_saturate_discriminator_loss(real_logits, fake_logits)
        else:
            raise NotImplementedError

    def comput_gen_loss(self, fake_logits):
        if self.gen_loss_type == "hinge":
            return hinge_gen_loss(fake_logits)
        elif self.gen_loss_type == "vanilla":
            return vanilla_gen_loss(fake_logits)
        elif self.gen_loss_type == "non_saturate":
            return non_saturate_gen_loss(fake_logits)
        else:
            raise NotImplementedError

    def _disc_loss_and_means(self, real_logits, fake_logits):
        """Fused: disc loss + mean(real) + mean(fake) with the logits read once."""
        if self.disc_loss_type in ("hinge", "vanilla"):
            elems = _hinge_elems if self.disc_loss_type == "hinge" else _vanilla_elems
            sums = _multi_sum_pallas(
                [lambda b, s: elems(b[0], b[1]),
                 lambda b, s: b[0],
                 lambda b, s: b[1]],
                [real_logits, fake_logits])
            T = real_logits.size
            return sums[0] / T / 2.0, sums[1] / T, sums[2] / fake_logits.size
        elif self.disc_loss_type == "non_saturate":
            B = fake_logits.shape[0]
            r2 = real_logits.reshape(B, -1)
            f2 = fake_logits.reshape(B, -1)
            sums = _row_sums_pallas([r2, f2])
            mr = sums[0] / r2.shape[1]
            mf = sums[1] / f2.shape[1]
            real_loss = _sigmoid_cross_entropy_with_logits(jnp.ones_like(mr), mr)
            fake_loss = _sigmoid_cross_entropy_with_logits(jnp.zeros_like(mf), mf)
            loss = jnp.mean(real_loss + fake_loss) / 2.0
            return loss, jnp.sum(sums[0]) / r2.size, jnp.sum(sums[1]) / f2.size
        else:
            raise NotImplementedError

    # ---- forward dispatch ----
    def forward(self, func="get_disc_loss", **kwargs):
        if func == "get_disc_loss":
            return self.get_disc_loss(**kwargs)
        elif func == "get_gan_loss":
            return self.get_gan_loss(**kwargs)

    __call__ = forward

    # ---- gradient penalty ----
    def calculate_gradient_penalty(self, real, real_logits, use_GP=False):
        if use_GP:
            return gradient_penalty(real, self.disc_forward)
        return self.zero

    def check_if_apply_gradient_penalty(self, lambda_grad_penalty=None,
                                        apply_gradient_penalty=False):
        return lambda_grad_penalty > 0 and apply_gradient_penalty

    # ---- discriminator-side loss ----
    def get_disc_loss(self, real, fake, lambda_disc_loss=None,
                      lambda_grad_penalty=None, apply_gradient_penalty=False):
        lambda_disc_loss = lambda_disc_loss or self.lambda_disc_loss
        lambda_grad_penalty = lambda_grad_penalty or self.lambda_grad_penalty
        use_GP = self.check_if_apply_gradient_penalty(
            lambda_grad_penalty, apply_gradient_penalty)

        real_logits = self.disc_forward(real)
        fake_logits = self.disc_forward(jax.lax.stop_gradient(fake))  # fake.detach()

        if self.lecam_ema is not None and self.lambda_lecam > 0:
            # one fused kernel: disc loss + both EMA means (logits streamed once)
            discr_loss, mean_real, mean_fake = self._disc_loss_and_means(
                real_logits, fake_logits)
            self.lecam_ema.update_from_means(mean_real, mean_fake)
            # one fused kernel: both LeCAM terms (logits streamed once more)
            lecam_loss = lecam_reg(real_logits, fake_logits, self.lecam_ema)
        else:
            discr_loss = self.compute_disc_loss(real_logits, fake_logits)
            lecam_loss = self.zero

        gradient_penalty_loss = self.calculate_gradient_penalty(real, real_logits, use_GP)

        loss_sum = (
            discr_loss * lambda_disc_loss
            + gradient_penalty_loss * lambda_grad_penalty
            + lecam_loss * self.lambda_lecam
        )
        return (
            loss_sum,
            {
                "discr_loss": discr_loss,
                "gradient_penalty_loss": gradient_penalty_loss,
                "lambda_disc_loss": lambda_disc_loss,
                "lambda_grad_penalty": lambda_grad_penalty,
                "lecam_loss": lecam_loss,
                "disc_loss_sum": loss_sum,
            },
        )

    # ---- generator-side loss ----
    def get_adaptive_weight(self, gen_loss, perceptual_loss=None, last_dec_layer=None):
        # TODO(synk): adaptive weight needs autograd of external decoder params
        # (grad_layer_wrt_loss); no in-kernel equivalent — returning 1.0.
        return 1.0

    def get_perceptual_loss(self, real, fake):
        if self.perceptual_model is None:
            return self.zero
        # TODO(synk): LPIPS-style perceptual model not available without checkpoints.
        return self.zero

    def get_gan_loss(self, real, fake, rec_loss=None, last_dec_layer=None,
                     lambda_adversarial_loss=None, lambda_perceptual_loss=None):
        if lambda_adversarial_loss is None:
            lambda_adversarial_loss = self.lambda_adversarial_loss
        lambda_perceptual_loss = lambda_perceptual_loss or self.lambda_perceptual_loss

        if lambda_perceptual_loss is None or lambda_perceptual_loss == 0.0:
            perceptual_loss = self.zero
        else:
            perceptual_loss = self.get_perceptual_loss(real, fake)

        if (lambda_adversarial_loss is None or lambda_perceptual_loss is None
                or lambda_adversarial_loss == 0.0 or rec_loss is None):
            gen_loss = self.zero
            adaptive_weight = 1.0
        else:
            fake_logits = self.disc_forward(fake)
            gen_loss = self.comput_gen_loss(fake_logits)
            if self.disable_adaptive_weight:
                adaptive_weight = 1.0
            else:
                adaptive_weight = self.get_adaptive_weight(
                    gen_loss,
                    perceptual_loss * lambda_perceptual_loss + rec_loss,
                    last_dec_layer,
                )

        loss_sum = (
            perceptual_loss * lambda_perceptual_loss
            + gen_loss * adaptive_weight * lambda_adversarial_loss
        )
        # NOTE: log values stay as device scalars (no float()/item() host syncs).
        return (
            loss_sum,
            {
                "perceptual_loss": perceptual_loss,
                "gen_loss": gen_loss,
                "adaptive_weight": adaptive_weight,
                "lambda_perceptual_loss": lambda_perceptual_loss,
                "lambda_adversarial_loss": lambda_adversarial_loss,
                "gan_loss_sum": loss_sum,
            },
        )


# ----------------------------------------------------------------------------------
# Demo / self-check
# ----------------------------------------------------------------------------------
if __name__ == "__main__":
    key = jax.random.PRNGKey(0)
    k1, k2, k3, k4 = jax.random.split(key, 4)
    # patch-discriminator style logits / images, NCHW like PyTorch
    real = jax.random.normal(k1, (2, 1, 16, 16), dtype=jnp.float32)
    fake = jax.random.normal(k2, (2, 1, 16, 16), dtype=jnp.float32)

    # --- hinge path (default) through the class ---
    disc = BaseDiscriminator(perceptual_model=None, disable_adaptive_weight=True)
    disc_loss_sum, disc_log = disc.forward(func="get_disc_loss", real=real, fake=fake)
    gan_loss_sum, gan_log = disc.forward(
        func="get_gan_loss", real=real, fake=fake, rec_loss=jnp.float32(0.1))
    gp_loss_sum, gp_log = disc.forward(
        func="get_disc_loss", real=real, fake=fake, apply_gradient_penalty=True)

    ref_hinge = jnp.mean(jnp.maximum(1.0 - real, 0.0) + jnp.maximum(1.0 + fake, 0.0)) / 2.0
    ref_gen = -jnp.mean(fake)
    assert abs(float(disc_log["discr_loss"]) - float(ref_hinge)) < 1e-5
    assert abs(float(gan_log["gen_loss"]) - float(ref_gen)) < 1e-5
    assert abs(float(disc_loss_sum) - float(ref_hinge)) < 1e-5
    assert abs(float(gp_log["gradient_penalty_loss"]) - 256.0) < 1e-3  # identity disc

    # --- LeCAM-enabled hinge path (fused 3-sum kernel + SMEM EMA scalars) ---
    disc_lc = BaseDiscriminator(perceptual_model=None, lambda_lecam=0.5)
    lc_sum, lc_log = disc_lc.forward(func="get_disc_loss", real=real, fake=fake)
    mr, mf = jnp.mean(real), jnp.mean(fake)
    er = 0.0 * 0.999 + mr * 0.001
    ef = 0.0 * 0.999 + mf * 0.001
    ref_lecam = (jnp.mean(jnp.maximum(real - ef, 0.0) ** 2)
                 + jnp.mean(jnp.maximum(er - fake, 0.0) ** 2))
    assert abs(float(lc_log["discr_loss"]) - float(ref_hinge)) < 1e-5
    assert abs(float(lc_log["lecam_loss"]) - float(ref_lecam)) < 1e-4
    assert abs(float(lc_sum) - float(ref_hinge + 0.5 * ref_lecam)) < 1e-4

    # --- vanilla losses ---
    ref_van = jnp.mean(jax.nn.softplus(-real) + jax.nn.softplus(fake)) / 2.0
    assert abs(float(vanilla_discr_loss(fake, real)) - float(ref_van)) < 1e-5
    ref_van_gen = jnp.mean(jax.nn.softplus(-fake))
    assert abs(float(vanilla_gen_loss(fake)) - float(ref_van_gen)) < 1e-5

    # --- non-saturating losses (fused per-row sum kernel) ---
    r2 = real.reshape(2, -1)
    f2 = fake.reshape(2, -1)
    mrr = r2.mean(-1)
    mff = f2.mean(-1)
    ref_ns = jnp.mean(
        _sigmoid_cross_entropy_with_logits(jnp.ones_like(mrr), mrr)
        + _sigmoid_cross_entropy_with_logits(jnp.zeros_like(mff), mff)) / 2.0
    assert abs(float(non_saturate_discriminator_loss(real, fake)) - float(ref_ns)) < 1e-5
    ref_nsg = jnp.mean(_sigmoid_cross_entropy_with_logits(jnp.ones_like(mff), mff))
    assert abs(float(non_saturate_gen_loss(fake)) - float(ref_nsg)) < 1e-5

    # --- non-divisible shape exercises the padded + in-kernel-masked path ---
    ra = jax.random.normal(k3, (2, 3, 5, 7), dtype=jnp.float32)
    fa = jax.random.normal(k4, (2, 3, 5, 7), dtype=jnp.float32)
    ref_h2 = jnp.mean(jnp.maximum(1.0 - ra, 0.0) + jnp.maximum(1.0 + fa, 0.0)) / 2.0
    assert abs(float(hinge_discr_loss(fa, ra)) - float(ref_h2)) < 1e-5

    jax.block_until_ready((disc_loss_sum, gan_loss_sum, gp_loss_sum, lc_sum))
    print("KERNEL_OK")
</pallas_src>

<mosaic_0001>
module attributes {stable_mosaic.version = 11 : i64} {
  func.func @kernel(%arg0: i32, %arg1: i32, %arg2: memref<4x128xf32, #tpu.memory_space<vmem>>, %arg3: memref<4x128xf32, #tpu.memory_space<vmem>>, %arg4: memref<1x1x128xf32, #tpu.memory_space<vmem>>, %arg5: memref<1x4x128xf32, #tpu.memory_space<vmem>>) attributes {dimension_semantics = [#tpu.dimension_semantics<parallel>, #tpu.dimension_semantics<arbitrary>], iteration_bounds = array<i64: 1, 1>, scalar_prefetch = 0 : i64, scratch_operands = 1 : i64, tpu.core_type = #tpu.core_type<tc>, window_params = [{transform_indices = @transform_0, window_bounds = array<i64: 4, 128>}, {transform_indices = @transform_1, window_bounds = array<i64: 4, 128>}, {transform_indices = @transform_2, window_bounds = array<i64: 1, 1, 128>}]} {
    %c0_i32 = arith.constant 0 : i32
    %0 = arith.cmpi eq, %arg1, %c0_i32 : i32
    %1 = arith.extui %0 : i1 to i32
    %c0_i32_0 = arith.constant 0 : i32
    %2 = arith.cmpi ne, %1, %c0_i32_0 : i32
    scf.if %2 {
      %cst_15 = arith.constant 0.000000e+00 : f32
      %23 = vector.broadcast %cst_15 : f32 to vector<1x4x128xf32>
      %c0_16 = arith.constant 0 : index
      %c0_17 = arith.constant 0 : index
      %c0_18 = arith.constant 0 : index
      %24 = vector.load %arg5[%c0_16, %c0_17, %c0_18] : memref<1x4x128xf32, #tpu.memory_space<vmem>>, vector<1x4x128xf32>
      tpu.vector_store %arg5[%c0_16, %c0_17, %c0_18], %23 {strides = array<i32>} : memref<1x4x128xf32, #tpu.memory_space<vmem>>, vector<1x4x128xf32>,
    } else {
    }
    %c0 = arith.constant 0 : index
    %c0_1 = arith.constant 0 : index
    %3 = vector.load %arg2[%c0, %c0_1] : memref<4x128xf32, #tpu.memory_space<vmem>>, vector<4x128xf32>
    %c0_2 = arith.constant 0 : index
    %c0_3 = arith.constant 0 : index
    %4 = vector.load %arg3[%c0_2, %c0_3] : memref<4x128xf32, #tpu.memory_space<vmem>>, vector<4x128xf32>
    %cst = arith.constant 1.000000e+00 : f32
    %5 = vector.broadcast %cst : f32 to vector<4x128xf32>
    %6 = arith.subf %5, %4 : vector<4x128xf32>
    %cst_4 = arith.constant 0.000000e+00 : f32
    %7 = vector.broadcast %cst_4 : f32 to vector<4x128xf32>
    %8 = arith.maximumf %6, %7 : vector<4x128xf32>
    %cst_5 = arith.constant 1.000000e+00 : f32
    %9 = vector.broadcast %cst_5 : f32 to vector<4x128xf32>
    %10 = arith.addf %9, %3 : vector<4x128xf32>
    %cst_6 = arith.constant 0.000000e+00 : f32
    %11 = vector.broadcast %cst_6 : f32 to vector<4x128xf32>
    %12 = arith.maximumf %10, %11 : vector<4x128xf32>
    %13 = arith.addf %8, %12 : vector<4x128xf32>
    %c0_7 = arith.constant 0 : index
    %c0_8 = arith.constant 0 : index
    %c0_9 = arith.constant 0 : index
    %14 = vector.load %arg5[%c0_7, %c0_8, %c0_9] : memref<1x4x128xf32, #tpu.memory_space<vmem>>, vector<1x4x128xf32>
    %15 = vector.shape_cast %14 : vector<1x4x128xf32> to vector<4x128xf32>
    %16 = arith.addf %15, %13 : vector<4x128xf32>
    %c0_10 = arith.constant 0 : index
    %c0_11 = arith.constant 0 : index
    %c0_12 = arith.constant 0 : index
    %17 = vector.load %arg5[%c0_10, %c0_11, %c0_12] : memref<1x4x128xf32, #tpu.memory_space<vmem>>, vector<1x4x128xf32>
    %18 = vector.shape_cast %17 : vector<1x4x128xf32> to vector<4x128xf32>
    %19 = vector.shape_cast %16 : vector<4x128xf32> to vector<1x4x128xf32>
    tpu.vector_store %arg5[%c0_10, %c0_11, %c0_12], %19 {strides = array<i32>} : memref<1x4x128xf32, #tpu.memory_space<vmem>>, vector<1x4x128xf32>,
    %c0_i32_13 = arith.constant 0 : i32
    %20 = arith.cmpi eq, %arg1, %c0_i32_13 : i32
    %21 = arith.extui %20 : i1 to i32
    %c0_i32_14 = arith.constant 0 : i32
    %22 = arith.cmpi ne, %21, %c0_i32_14 : i32
    scf.if %22 {
      %c0_15 = arith.constant 0 : index
      %c0_16 = arith.constant 0 : index
      %c0_17 = arith.constant 0 : index
      %23 = vector.load %arg5[%c0_15, %c0_16, %c0_17] : memref<1x4x128xf32, #tpu.memory_space<vmem>>, vector<1x4x128xf32>
      %24 = vector.shape_cast %23 : vector<1x4x128xf32> to vector<4x128xf32>
      %cst_18 = arith.constant dense<0.000000e+00> : vector<128xf32>
      %25 = vector.multi_reduction <add>, %24, %cst_18 [0] : vector<4x128xf32> to vector<128xf32>
      %26 = vector.shape_cast %25 : vector<128xf32> to vector<1x128xf32>
      %c0_19 = arith.constant 0 : index
      %c0_20 = arith.constant 0 : index
      %c0_21 = arith.constant 0 : index
      %27 = vector.load %arg4[%c0_19, %c0_20, %c0_21] : memref<1x1x128xf32, #tpu.memory_space<vmem>>, vector<1x1x128xf32>
      %28 = vector.shape_cast %27 : vector<1x1x128xf32> to vector<1x128xf32>
      %29 = vector.shape_cast %26 : vector<1x128xf32> to vector<1x1x128xf32>
      tpu.vector_store %arg4[%c0_19, %c0_20, %c0_21], %29 {strides = array<i32>} : memref<1x1x128xf32, #tpu.memory_space<vmem>>, vector<1x1x128xf32>,
    } else {
    }
    return
  }
  func.func @transform_0(%arg0: i32, %arg1: i32) -> (i32, i32) {
    %c1_i32 = arith.constant 1 : i32
    %0 = arith.muli %arg0, %c1_i32 : i32
    %1 = arith.addi %0, %arg1 : i32
    %c0_i32 = arith.constant 0 : i32
    %c0_i32_0 = arith.constant 0 : i32
    return %1, %c0_i32 : i32, i32
  }
  func.func @transform_1(%arg0: i32, %arg1: i32) -> (i32, i32) {
    %c1_i32 = arith.constant 1 : i32
    %0 = arith.muli %arg0, %c1_i32 : i32
    %1 = arith.addi %0, %arg1 : i32
    %c0_i32 = arith.constant 0 : i32
    %c0_i32_0 = arith.constant 0 : i32
    return %1, %c0_i32 : i32, i32
  }
  func.func @transform_2(%arg0: i32, %arg1: i32) -> (i32, i32, i32) {
    %c0_i32 = arith.constant 0 : i32
    %c0_i32_0 = arith.constant 0 : i32
    %c0_i32_1 = arith.constant 0 : i32
    return %arg0, %c0_i32, %c0_i32_0 : i32, i32, i32
  }
}

</mosaic_0001>

<llo_original>
// kernel: tpu_custom_call.1
$region0: #{tpu_custom_call.1}
  #allocation0 [shape = 'u32[]', space=smem, size = 0x4, offset = 0x4, fixed_abs, tag = 'smem constant byte address 0x4 - core index']
  #allocation1 [shape = 'u32[144,128]{1,0:T(1,128)}', space=vmem, size = 0x12000, scoped, tag = 'internal scratch']
  #allocation2 [shape = 'f32[1,4,128]{2,1,0:T(4,128)}', space=vmem, size = 0x800, scoped, tag = 'scratch operand']
  %s0 = inlined_call_operand.hbm [shape: f32[4,128], index: 0, kind: input, shape index: {}]
  %s1 = inlined_call_operand.hbm [shape: f32[4,128], index: 1, kind: input, shape index: {}]
  %s2 = inlined_call_operand.hbm [shape: f32[1,1,128], index: 2, kind: output, shape index: {}]
  %s3 = sld [smem:[#allocation0]]
  $region34: #{tpu_custom_call.1} parent=0
    _
  %s5 = ssub.s32 1, %s3
  %s6 = scalar_select 0, %s5, %s3
  $region1: #{tpu_custom_call.1} parent=0
    #allocation3 [shape = 'u8[2048]{0}', space=vmem, size = 0x800, scoped, tag = 'input window, operand 0, single buffered']
    #allocation4 [shape = 's32[1]{0}', space=sflag, size = 0x4, scoped, tag = 'scoped memory for tpu_custom_call.1']
    #allocation5 [shape = 's32[1]{0}', space=sflag, size = 0x4, scoped, tag = 'scoped memory for tpu_custom_call.1']
    #allocation6 [shape = 'u8[2048]{0}', space=vmem, size = 0x800, scoped, tag = 'input window, operand 1, single buffered']
    #allocation7 [shape = 's32[1]{0}', space=sflag, size = 0x4, scoped, tag = 'scoped memory for tpu_custom_call.1']
    #allocation8 [shape = 'u8[512]{0}', space=vmem, size = 0x400, scoped, tag = 'output window, operand 0, single buffered']
    %7 = vsyncpa [#allocation4], 0
    %8 = vsyncpa [#allocation7], 0
    %9 = vsyncpa [#allocation5], 0
    // Predicated region
    $region2: #{tpu_custom_call.1} parent=1 // pred_check
      _
    $region3: #{tpu_custom_call.1} parent=1 // pred_check_branch
      %11 = sbr.rel (0) target = $region5
    $region4: #{tpu_custom_call.1} parent=1 // pred_region
      %s12 = sadd.s32 0, 0
      %s14 = ssub.s32 64, 64
      %15 = vsyncadd [#allocation4], %s14
      %s16 = smul.addr %s12, 64
      %s17 = scalar_lea.hbm %s0, %s16
      %s19 = sshll.u32 [#allocation3], 4
      %s20 = int_to_ptr.vmem [resolvable:$true] %s19
      %22 = dma.hbm_to_vmem [thread:$0]  %s17, 64, %s20, [#allocation4]
    $region5: #{tpu_custom_call.1} parent=1 // pred_fallthru
      _
    // Predicated region
    $region6: #{tpu_custom_call.1} parent=1 // pred_check
      _
    $region7: #{tpu_custom_call.1} parent=1 // pred_check_branch
      %24 = sbr.rel (0) target = $region9
    $region8: #{tpu_custom_call.1} parent=1 // pred_region
      %s25 = sadd.s32 0, 0
      %s27 = ssub.s32 64, 64
      %28 = vsyncadd [#allocation7], %s27
      %s29 = smul.addr %s25, 64
      %s30 = scalar_lea.hbm %s1, %s29
      %s32 = sshll.u32 [#allocation6], 4
      %s33 = int_to_ptr.vmem [resolvable:$true] %s32
      %35 = dma.hbm_to_vmem [thread:$0]  %s30, 64, %s33, [#allocation7]
    $region9: #{tpu_custom_call.1} parent=1 // pred_fallthru
      _
    // Predicated region
    $region10: #{tpu_custom_call.1} parent=1 // pred_check
      _
    $region11: #{tpu_custom_call.1} parent=1 // pred_check_branch
      %37 = sbr.rel (0) target = $region13
    $region12: #{tpu_custom_call.1} parent=1 // pred_region
      %38 = dma.done [#allocation4], 64
    $region13: #{tpu_custom_call.1} parent=1 // pred_fallthru
      _
    // Predicated region
    $region14: #{tpu_custom_call.1} parent=1 // pred_check
      _
    $region15: #{tpu_custom_call.1} parent=1 // pred_check_branch
      %40 = sbr.rel (0) target = $region17
    $region16: #{tpu_custom_call.1} parent=1 // pred_region
      %41 = dma.done [#allocation7], 64
    $region17: #{tpu_custom_call.1} parent=1 // pred_fallthru
      _
    %s42 = sadd.s32 0, 0
    %s43 = sadd.s32 0, 0
    %p44 = scmp.eq.s32.totalorder 0, 0
    // Predicated region
    $region18: #{tpu_custom_call.1} parent=1 // pred_check
      %p45 = pneg %p44
    $region19: #{tpu_custom_call.1} parent=1 // pred_check_branch
      %47 = sbr.rel (%p45) target = $region21
    $region20: #{tpu_custom_call.1} parent=1 // pred_region
      %48 = vst [vmem:[#allocation2] sm:$0xf] 0.0
    $region21: #{tpu_custom_call.1} parent=1 // pred_fallthru
      _
    %v49 = vld [vmem:[#allocation3] sm:$0xf]
    %v50 = vld [vmem:[#allocation6] sm:$0xf]
    %v51 = vsub.f32 1.0, %v50
    %v52 = vmax.f32 %v51, 0.0
    %v53 = vadd.f32 %v49, 1.0
    %v54 = vmax.f32 %v53, 0.0
    %v55 = vadd.f32 %v52, %v54
    %v56 = vld [vmem:[#allocation2] sm:$0xf]
    %v57 = vadd.f32 %v56, %v55
    %58 = vst [vmem:[#allocation2] sm:$0xf] %v57
    // Predicated region
    $region22: #{tpu_custom_call.1} parent=1 // pred_check
      %p59 = pneg %p44
    $region23: #{tpu_custom_call.1} parent=1 // pred_check_branch
      %61 = sbr.rel (%p59) target = $region25
    $region24: #{tpu_custom_call.1} parent=1 // pred_region
      %v62 = vld [vmem:[#allocation2] sm:$0xf]
      %vm63 = vcmask 1043456
      %v64 = vsel %vm63, %v62, 0.0
      %v65 = vrot.slane %v64, 4
      %v66 = vadd.f32 %v64, %v65
      %v67 = vrot.slane %v66, 2
      %v68 = vadd.f32 %v66, %v67
      %v69 = vrot.slane %v68, 1
      %v70 = vadd.f32 %v68, %v69
      %71 = vst [vmem:[#allocation8] sm:$0x1] %v70
    $region25: #{tpu_custom_call.1} parent=1 // pred_fallthru
      _
    // Predicated region
    $region26: #{tpu_custom_call.1} parent=1 // pred_check
      _
    $region27: #{tpu_custom_call.1} parent=1 // pred_check_branch
      %73 = sbr.rel (0) target = $region29
    $region28: #{tpu_custom_call.1} parent=1 // pred_region
      %s75 = ssub.s32 16, 16
      %76 = vsyncadd [#allocation5], %s75
      %s78 = sshll.u32 [#allocation8], 4
      %s79 = int_to_ptr.vmem [resolvable:$true] %s78
      %81 = dma.vmem_to_hbm [thread:$0]  %s79, 16, %s2, [#allocation5]
    $region29: #{tpu_custom_call.1} parent=1 // pred_fallthru
      _
    // Predicated region
    $region30: #{tpu_custom_call.1} parent=1 // pred_check
      _
    $region31: #{tpu_custom_call.1} parent=1 // pred_check_branch
      %83 = sbr.rel (0) target = $region33
    $region32: #{tpu_custom_call.1} parent=1 // pred_region
      %84 = dma.done [#allocation5], 16
    $region33: #{tpu_custom_call.1} parent=1 // pred_fallthru
      _
    %85 = vsyncpa [#allocation4], 1
    %86 = vsyncpa [#allocation7], 1
    %87 = vsyncpa [#allocation5], 1

</llo_original>
